<compile_context>
chip_gen: v6e
topology: v6e:2x2x1
jax: 0.10.0
libtpu: 0.0.40
codegen_flags: <defaults>
</compile_context>

<pallas_src>
import jax
import jax.numpy as jnp
from jax.experimental import pallas as pl
from jax.experimental.pallas import tpu as pltpu


def _round_up(n: int, m: int) -> int:
    return ((n + m - 1) // m) * m


def _make_corr2d_kernel(kh: int, kw: int):
    """Builds the kernel for a static (kh, kw) tap pattern."""
    has_halo = kh > 1

    def kernel(w_ref, b_ref, x_ref, *rest):
        # w_ref: (kh*kw,) f32 in SMEM, b_ref: (1,) f32 in SMEM
        # x_ref: (tile_oh, wp_in) f32 in VMEM (this tile's rows, full width)
        # halo_ref (only if kh > 1): (8, wp_in) rows just below this tile
        # o_ref: (tile_oh, wp_out) f32 in VMEM, wp_out % 128 == 0 (lane dense)
        if has_halo:
            halo_ref, o_ref = rest
            x = jnp.concatenate([x_ref[...], halo_ref[...]], axis=0)
        else:
            (o_ref,) = rest
            x = x_ref[...]
        tile_oh, wp_out = o_ref.shape

        # First tap initialises the accumulator (saves a vreg zero-fill +
        # add); each tap is a statically shifted window of the resident tile
        # times a scalar broadcast from SMEM -> pure VPU multiply-add.
        acc = x[0:tile_oh, 0:wp_out] * w_ref[0]
        for a in range(kh):
            for kj in range(kw):
                if a == 0 and kj == 0:
                    continue
                acc = acc + x[a:a + tile_oh, kj:kj + wp_out] * w_ref[a * kw + kj]
        o_ref[...] = acc + b_ref[0]

    return kernel


def conv2d_forward(x, weight, bias, *, tile_oh=None,
                   vmem_budget_bytes=8 * 1024 * 1024):
    """Equivalent of Conv2D.forward: corr2d(x, weight) + bias."""
    x = jnp.asarray(x, jnp.float32)
    weight = jnp.asarray(weight, jnp.float32)
    bias = jnp.asarray(bias, jnp.float32).reshape(-1)

    H, W = x.shape
    kh, kw = weight.shape
    oh, ow = H - kh + 1, W - kw + 1
    assert oh >= 1 and ow >= 1, "kernel larger than input"
    # TODO(synk): kernels taller than 9 rows need a taller / tiled row halo.
    assert kh <= 9, "row-halo path supports kh <= 9"

    # Lane-dense output: stored width padded to a multiple of 128 so stores
    # are full vregs (unmasked vst); the real (oh, ow) window is sliced back.
    wp_out = _round_up(ow, 128)
    wp_in = wp_out + kw - 1           # columns needed by all kw column taps

    # Output-row tile: a multiple of 8 sublanes, sized so the double-buffered
    # input + output blocks stay well inside the scoped VMEM limit on every
    # generation (16 MiB v5e / 32 MiB v6e / 32-of-64 MiB v7x).
    if tile_oh is None:
        per_row_bytes = (wp_in + wp_out) * 4 * 2      # f32, double-buffered
        tile_oh = max(8, min(512, (vmem_budget_bytes // per_row_bytes) // 8 * 8))
    tile_oh = min(int(tile_oh), _round_up(oh, 8))
    assert tile_oh % 8 == 0
    # TODO(synk): also tile the width for extremely wide images (W >> 10k).

    num_tiles = -(-oh // tile_oh)
    hp_out = num_tiles * tile_oh
    need_halo = kh > 1
    hp_in = hp_out + (8 if need_halo else 0)

    x_pad = jnp.zeros((hp_in, wp_in), jnp.float32).at[:H, :W].set(x)
    w_flat = weight.reshape(-1)       # (kh*kw,) scalar taps for SMEM

    in_specs = [
        pl.BlockSpec(memory_space=pltpu.MemorySpace.SMEM),    # weight taps
        pl.BlockSpec(memory_space=pltpu.MemorySpace.SMEM),    # bias
        pl.BlockSpec((tile_oh, wp_in), lambda i: (i, 0)),     # x row tile
    ]
    operands = [w_flat, bias, x_pad]
    if need_halo:
        # 8 extra rows starting right below this tile supply the kh-1 row
        # halo (kh <= 9) without needing overlapping block windows.
        blk = tile_oh // 8
        in_specs.append(
            pl.BlockSpec((8, wp_in), lambda i, _blk=blk: ((i + 1) * _blk, 0)))
        operands.append(x_pad)

    out_padded = pl.pallas_call(
        _make_corr2d_kernel(kh, kw),
        out_shape=jax.ShapeDtypeStruct((hp_out, wp_out), jnp.float32),
        grid=(num_tiles,),
        in_specs=in_specs,
        out_specs=pl.BlockSpec((tile_oh, wp_out), lambda i: (i, 0)),
        compiler_params=pltpu.CompilerParams(
            # Row tiles are independent -> shard across v7x's 2 TensorCores
            # (no-op on single-TC v5e/v6e).
            dimension_semantics=("parallel",),
            vmem_limit_bytes=32 * 1024 * 1024,
        ),
    )(*operands)

    return out_padded[:oh, :ow]


def _corr2d_ref(x, k):
    """Pure-JAX reference equal to the PyTorch corr2d double loop."""
    kh, kw = k.shape
    oh, ow = x.shape[0] - kh + 1, x.shape[1] - kw + 1
    out = jnp.zeros((oh, ow), jnp.float32)
    for a in range(kh):
        for b in range(kw):
            out = out + x[a:a + oh, b:b + ow] * k[a, b]
    return out


if __name__ == "__main__":
    key = jax.random.PRNGKey(0)
    k_x, k_w, k_x2, k_w2, k_b2 = jax.random.split(key, 5)

    # 1) Shapes from the original script: X is 6x8, kernel_size = (1, 2),
    #    weight ~ U[0,1) (nn.Parameter(torch.rand)), bias = zeros(1).
    H, W = 6, 8
    x = jax.random.normal(k_x, (H, W), dtype=jnp.float32)
    weight = jax.random.uniform(k_w, (1, 2), dtype=jnp.float32)
    bias = jnp.zeros((1,), dtype=jnp.float32)

    out = jax.block_until_ready(conv2d_forward(x, weight, bias))
    ref = _corr2d_ref(x, weight) + bias[0]
    assert out.shape == (6, 7)
    assert jnp.allclose(out, ref, atol=1e-5, rtol=1e-5)

    # 2) The edge-detection example from the script: K = [[1, -1]].
    x_edge = jnp.ones((6, 8), jnp.float32).at[:, 2:6].set(0.0)
    k_edge = jnp.array([[1.0, -1.0]], jnp.float32)
    out_edge = jax.block_until_ready(conv2d_forward(x_edge, k_edge, bias))
    assert jnp.allclose(out_edge, _corr2d_ref(x_edge, k_edge), atol=1e-5)

    # 3) A multi-tile run (forced small row tile) to exercise the pipelined grid.
    x2 = jax.random.normal(k_x2, (48, 200), dtype=jnp.float32)
    w2 = jax.random.uniform(k_w2, (1, 2), dtype=jnp.float32)
    b2 = 0.1 * jax.random.normal(k_b2, (1,), dtype=jnp.float32)
    out2 = jax.block_until_ready(conv2d_forward(x2, w2, b2, tile_oh=8))
    ref2 = _corr2d_ref(x2, w2) + b2[0]
    assert out2.shape == (48, 199)
    assert jnp.allclose(out2, ref2, atol=1e-5, rtol=1e-5)

    print("KERNEL_OK")
</pallas_src>

<mosaic_0001>
module attributes {stable_mosaic.version = 11 : i64} {
  func.func @kernel(%arg0: i32, %arg1: memref<2xf32, #tpu.memory_space<smem>>, %arg2: memref<1xf32, #tpu.memory_space<smem>>, %arg3: memref<8x129xf32, #tpu.memory_space<vmem>>, %arg4: memref<8x128xf32, #tpu.memory_space<vmem>>) attributes {dimension_semantics = [#tpu.dimension_semantics<parallel>], iteration_bounds = array<i64: 1>, scalar_prefetch = 0 : i64, scratch_operands = 0 : i64, tpu.core_type = #tpu.core_type<tc>, window_params = [{transform_indices = @transform_0, window_bounds = array<i64: 2>}, {transform_indices = @transform_1, window_bounds = array<i64: 1>}, {transform_indices = @transform_2, window_bounds = array<i64: 8, 129>}, {transform_indices = @transform_3, window_bounds = array<i64: 8, 128>}]} {
    %c0 = arith.constant 0 : index
    %c0_0 = arith.constant 0 : index
    %0 = vector.load %arg3[%c0, %c0_0] : memref<8x129xf32, #tpu.memory_space<vmem>>, vector<8x129xf32>
    %1 = vector.extract_strided_slice %0 {offsets = [0, 0], sizes = [8, 128], strides = [1, 1]} : vector<8x129xf32> to vector<8x128xf32>
    %c0_1 = arith.constant 0 : index
    %2 = memref.load %arg1[%c0_1] : memref<2xf32, #tpu.memory_space<smem>>
    %3 = vector.broadcast %2 : f32 to vector<8x128xf32>
    %4 = arith.mulf %1, %3 : vector<8x128xf32>
    %5 = vector.extract_strided_slice %0 {offsets = [0, 1], sizes = [8, 128], strides = [1, 1]} : vector<8x129xf32> to vector<8x128xf32>
    %c1 = arith.constant 1 : index
    %6 = memref.load %arg1[%c1] : memref<2xf32, #tpu.memory_space<smem>>
    %7 = vector.broadcast %6 : f32 to vector<8x128xf32>
    %8 = arith.mulf %5, %7 : vector<8x128xf32>
    %9 = arith.addf %4, %8 : vector<8x128xf32>
    %c0_2 = arith.constant 0 : index
    %10 = memref.load %arg2[%c0_2] : memref<1xf32, #tpu.memory_space<smem>>
    %11 = vector.broadcast %10 : f32 to vector<8x128xf32>
    %12 = arith.addf %9, %11 : vector<8x128xf32>
    %c0_3 = arith.constant 0 : index
    %c0_4 = arith.constant 0 : index
    %13 = vector.load %arg4[%c0_3, %c0_4] : memref<8x128xf32, #tpu.memory_space<vmem>>, vector<8x128xf32>
    tpu.vector_store %arg4[%c0_3, %c0_4], %12 {strides = array<i32>} : memref<8x128xf32, #tpu.memory_space<vmem>>, vector<8x128xf32>,
    return
  }
  func.func @transform_0(%arg0: i32) -> i32 {
    %c0_i32 = arith.constant 0 : i32
    %c0_i32_0 = arith.constant 0 : i32
    return %c0_i32 : i32
  }
  func.func @transform_1(%arg0: i32) -> i32 {
    %c0_i32 = arith.constant 0 : i32
    %c0_i32_0 = arith.constant 0 : i32
    return %c0_i32 : i32
  }
  func.func @transform_2(%arg0: i32) -> (i32, i32) {
    %c0_i32 = arith.constant 0 : i32
    %c0_i32_0 = arith.constant 0 : i32
    return %arg0, %c0_i32 : i32, i32
  }
  func.func @transform_3(%arg0: i32) -> (i32, i32) {
    %c0_i32 = arith.constant 0 : i32
    %c0_i32_0 = arith.constant 0 : i32
    return %arg0, %c0_i32 : i32, i32
  }
}

</mosaic_0001>

<llo_original>
// kernel: tpu_custom_call.1
$region0: #{tpu_custom_call.1}
  #allocation0 [shape = 'u32[]', space=smem, size = 0x4, offset = 0x4, fixed_abs, tag = 'smem constant byte address 0x4 - core index']
  #allocation1 [shape = 'u32[144,128]{1,0:T(1,128)}', space=vmem, size = 0x12000, scoped, tag = 'internal scratch']
  #allocation2 [shape = 'f32[1]{0:T(128)S(6)}', space=smem, size = 0x200, scoped, tag = 'scoped memory for tpu_custom_call.1']
  %s0 = inlined_call_operand.vmem [shape: f32[2], index: 0, kind: input, shape index: {}]
  %s1 = inlined_call_operand.<no memory space> [shape: f32[1], index: 1, kind: input, shape index: {}]
  %s2 = inlined_call_operand.hbm [shape: f32[8,129], index: 2, kind: input, shape index: {}]
  %s3 = inlined_call_operand.hbm [shape: f32[8,128], index: 3, kind: output, shape index: {}]
  %s4 = sld [smem:[#allocation0]]
  $region30: #{tpu_custom_call.1} parent=0
    _
  %s6 = ssub.s32 1, %s4
  %s7 = scalar_select 0, %s6, %s4
  %8 = sst [smem:[#allocation2]] %s1
  $region1: #{tpu_custom_call.1} parent=0
    #allocation3 [shape = 'u8[512]{0}', space=smem, size = 0x200, scoped, tag = 'input window, operand 0, single buffered']
    #allocation4 [shape = 's32[1]{0}', space=sflag, size = 0x4, scoped, tag = 'scoped memory for tpu_custom_call.1']
    #allocation5 [shape = 's32[1]{0}', space=sflag, size = 0x4, scoped, tag = 'scoped memory for tpu_custom_call.1']
    #allocation6 [shape = 's32[1]{0}', space=sflag, size = 0x4, scoped, tag = 'scoped memory for tpu_custom_call.1']
    #allocation7 [shape = 'u8[8192]{0}', space=vmem, size = 0x2000, scoped, tag = 'input window, operand 2, single buffered']
    #allocation8 [shape = 'u8[4096]{0}', space=vmem, size = 0x1000, scoped, tag = 'output window, operand 0, single buffered']
    %9 = vsyncpa [#allocation6], 0
    %10 = vsyncpa [#allocation4], 0
    %11 = vsyncpa [#allocation5], 0
    // Predicated region
    $region2: #{tpu_custom_call.1} parent=1 // pred_check
      _
    $region3: #{tpu_custom_call.1} parent=1 // pred_check_branch
      %13 = sbr.rel (0) target = $region5
    $region4: #{tpu_custom_call.1} parent=1 // pred_region
      %s15 = ssub.s32 16, 16
      %16 = vsyncadd [#allocation6], %s15
      %s18 = sshll.u32 %s0, 4
      %s19 = int_to_ptr.vmem [resolvable:$true] %s18
      %21 = dma.vmem_to_smem %s19, 16, [#allocation3], [#allocation6]
    $region5: #{tpu_custom_call.1} parent=1 // pred_fallthru
      _
    // Predicated region
    $region6: #{tpu_custom_call.1} parent=1 // pred_check
      _
    $region7: #{tpu_custom_call.1} parent=1 // pred_check_branch
      %23 = sbr.rel (0) target = $region9
    $region8: #{tpu_custom_call.1} parent=1 // pred_region
      _
    $region9: #{tpu_custom_call.1} parent=1 // pred_fallthru
      _
    // Predicated region
    $region10: #{tpu_custom_call.1} parent=1 // pred_check
      _
    $region11: #{tpu_custom_call.1} parent=1 // pred_check_branch
      %25 = sbr.rel (0) target = $region13
    $region12: #{tpu_custom_call.1} parent=1 // pred_region
      %s27 = ssub.s32 256, 256
      %28 = vsyncadd [#allocation4], %s27
      %s30 = sshll.u32 [#allocation7], 4
      %s31 = int_to_ptr.vmem [resolvable:$true] %s30
      %33 = dma.hbm_to_vmem [thread:$0]  %s2, 256, %s31, [#allocation4]
    $region13: #{tpu_custom_call.1} parent=1 // pred_fallthru
      _
    // Predicated region
    $region14: #{tpu_custom_call.1} parent=1 // pred_check
      _
    $region15: #{tpu_custom_call.1} parent=1 // pred_check_branch
      %35 = sbr.rel (0) target = $region17
    $region16: #{tpu_custom_call.1} parent=1 // pred_region
      %36 = dma.done [#allocation6], 16
    $region17: #{tpu_custom_call.1} parent=1 // pred_fallthru
      _
    // Predicated region
    $region18: #{tpu_custom_call.1} parent=1 // pred_check
      _
    $region19: #{tpu_custom_call.1} parent=1 // pred_check_branch
      %38 = sbr.rel (0) target = $region21
    $region20: #{tpu_custom_call.1} parent=1 // pred_region
      %39 = dma.done [#allocation4], 256
    $region21: #{tpu_custom_call.1} parent=1 // pred_fallthru
      _
    %40 = sfence
    %v41 = vld [vmem:[#allocation7] sm:$0xff]
    %v42 = vld [vmem:[#allocation7 + $0x8] sm:$0xff]
    %s43 = sld [smem:[#allocation3]]
    %v44 = vstv %s43
    %v45 = vmul.f32 %v41, %v44
    %s46 = sld [smem:[#allocation3 + $0x1]]
    %v47 = vstv %s46
    %v48 = vmul.f32 %v41, %v47
    %v49 = vmul.f32 %v42, %v47
    %52 = vrot.lane.b32.xlu0 %v48, 127
    %v53 = vpop.permute.xlu0 %52
    %54 = vrot.lane.b32.xlu0 %v49, 127
    %v55 = vpop.permute.xlu0 %54
    %vm56 = vcmask 1039360
    %v57 = vsel %vm56, %v53, %v55
    %v59 = vadd.f32 %v45, %v57
    %s60 = sld [smem:[#allocation2]]
    %v61 = vstv %s60
    %v62 = vadd.f32 %v59, %v61
    %63 = vst [vmem:[#allocation8] sm:$0xff] %v62
    // Predicated region
    $region22: #{tpu_custom_call.1} parent=1 // pred_check
      _
    $region23: #{tpu_custom_call.1} parent=1 // pred_check_branch
      %65 = sbr.rel (0) target = $region25
    $region24: #{tpu_custom_call.1} parent=1 // pred_region
      %s67 = ssub.s32 128, 128
      %68 = vsyncadd [#allocation5], %s67
      %s70 = sshll.u32 [#allocation8], 4
      %s71 = int_to_ptr.vmem [resolvable:$true] %s70
      %73 = dma.vmem_to_hbm [thread:$0]  %s71, 128, %s3, [#allocation5]
    $region25: #{tpu_custom_call.1} parent=1 // pred_fallthru
      _
    // Predicated region
    $region26: #{tpu_custom_call.1} parent=1 // pred_check
      _
    $region27: #{tpu_custom_call.1} parent=1 // pred_check_branch
      %75 = sbr.rel (0) target = $region29
    $region28: #{tpu_custom_call.1} parent=1 // pred_region
      %76 = dma.done [#allocation5], 128
    $region29: #{tpu_custom_call.1} parent=1 // pred_fallthru
      _
    %77 = vsyncpa [#allocation4], 1
    %78 = vsyncpa [#allocation5], 1
    %79 = vsyncpa [#allocation6], 1

</llo_original>
